<compile_context>
chip_gen: v5e
topology: v5e:2x2
jax: 0.10.0
libtpu: 0.0.40
codegen_flags: <defaults>
</compile_context>

<pallas_src>
import functools

import jax
import jax.numpy as jnp
from jax.experimental import pallas as pl
from jax.experimental.pallas import tpu as pltpu


# Padded internal widths (lane-dense: multiples of 128).
# Note: 128 exactly fills v5e's 128x128 MXU; on v6e/v7x (256x256 MXU) the
# passes are underfilled, but padding hidden dims further to 256 would add
# pure zero-FLOPs — not worth it for a DMA/overhead-bound MLP this small.
H1_PAD = 128   # 96  -> 128
H2_PAD = 256   # 192 -> 256
H3_PAD = 128   # 96  -> 128


def _round_up(x, m):
    return ((x + m - 1) // m) * m


def _cdiv(a, b):
    return (a + b - 1) // b


def dqn_kernel(x_ref,
               w1_ref, b1_ref,
               w2_ref, b2_ref,
               w3_ref, b3_ref,
               w4_ref, b4_ref,
               o_ref):
    # x_ref: (tb, in_dim); weights are stored (in, out) so y = x @ W + b
    # (== x @ W_pt.T + b of the PyTorch Linear).
    x = x_ref[...]

    # Matmuls accumulate in f32; bias + ReLU in f32; downcast once per layer.
    h1 = jnp.dot(x, w1_ref[...], preferred_element_type=jnp.float32) + b1_ref[...]
    h1 = jnp.maximum(h1, 0.0).astype(x.dtype)

    h2 = jnp.dot(h1, w2_ref[...], preferred_element_type=jnp.float32) + b2_ref[...]
    h2 = jnp.maximum(h2, 0.0).astype(x.dtype)

    h3 = jnp.dot(h2, w3_ref[...], preferred_element_type=jnp.float32) + b3_ref[...]
    h3 = jnp.maximum(h3, 0.0).astype(x.dtype)

    qvals = jnp.dot(h3, w4_ref[...], preferred_element_type=jnp.float32) + b4_ref[...]
    o_ref[...] = qvals.astype(o_ref.dtype)


def _choose_batch_tiling(batch, block_b):
    """Pick (tb, B_pad, n_tiles): even n_tiles >= 2, balanced sublane-aligned tiles."""
    n_tiles = max(2, _cdiv(batch, block_b))
    if n_tiles % 2:
        n_tiles += 1                      # even split -> both v7x TCs balanced
    tb = _round_up(_cdiv(batch, n_tiles), 8)
    return tb, tb * n_tiles, n_tiles


@functools.partial(jax.jit, static_argnames=("output_dim", "block_b"))
def dqn_forward(state, params, output_dim, block_b=512):
    """state: (B, input_dim); params: list of (W, b), W is (in_pad, out_pad).

    Returns (B, output_dim) Q-values in the params' compute dtype, numerically
    matching the PyTorch module's forward (padded lanes carry exact zeros and
    are sliced off; bf16 params imply bf16 activation rounding between layers).
    """
    B, in_dim = state.shape
    out_pad = params[-1][0].shape[1]
    compute_dtype = params[0][0].dtype

    tb, B_pad, n_tiles = _choose_batch_tiling(B, block_b)
    if B_pad != B:
        state = jnp.pad(state, ((0, B_pad - B), (0, 0)))
    state = state.astype(compute_dtype)

    flat_args = [state]
    for w, b in params:
        flat_args.append(w)
        flat_args.append(b)

    # x / out are tiled over batch; parameters are VMEM-resident
    # (constant index_map -> never re-fetched across grid steps).
    x_spec = pl.BlockSpec((tb, in_dim), lambda i: (i, 0))
    param_specs = []
    for w, b in params:
        param_specs.append(pl.BlockSpec(w.shape, lambda i: (0, 0)))
        param_specs.append(pl.BlockSpec(b.shape, lambda i: (0, 0)))
    out_spec = pl.BlockSpec((tb, out_pad), lambda i: (i, 0))

    out_padded = pl.pallas_call(
        dqn_kernel,
        out_shape=jax.ShapeDtypeStruct((B_pad, out_pad), compute_dtype),
        grid=(n_tiles,),
        in_specs=[x_spec] + param_specs,
        out_specs=out_spec,
        compiler_params=pltpu.CompilerParams(
            dimension_semantics=("parallel",),
            vmem_limit_bytes=32 * 1024 * 1024,
        ),
    )(*flat_args)

    return out_padded[:B, :output_dim]


def init_dqn_params(key, input_dim, output_dim, dtype=jnp.bfloat16):
    """PyTorch-Linear-style init (uniform +-1/sqrt(fan_in)) with lane padding.

    Weights are stored as (in_pad, out_pad); biases as (1, out_pad). Padded rows
    and columns (including padded bias entries) are exact zeros, so padded lanes
    stay zero through every layer and the final slice recovers the unpadded
    result. Default dtype is bf16 (f32 MXU accumulation is kept in the kernel);
    pass dtype=jnp.float32 for bit-tight checks.
    """
    logical_dims = [input_dim, 96, 192, 96, output_dim]
    padded_dims = [input_dim, H1_PAD, H2_PAD, H3_PAD, _round_up(output_dim, 128)]

    params = []
    for i in range(4):
        fan_in, fan_out = logical_dims[i], logical_dims[i + 1]
        pin, pout = padded_dims[i], padded_dims[i + 1]
        key, kw, kb = jax.random.split(key, 3)
        bound = 1.0 / jnp.sqrt(jnp.float32(fan_in))
        w = jax.random.uniform(kw, (fan_in, fan_out), jnp.float32, -bound, bound)
        b = jax.random.uniform(kb, (1, fan_out), jnp.float32, -bound, bound)
        w = jnp.pad(w, ((0, pin - fan_in), (0, pout - fan_out)))
        b = jnp.pad(b, ((0, 0), (0, pout - fan_out)))
        params.append((w.astype(dtype), b.astype(dtype)))
    return params


def dqn_reference(state, params, output_dim):
    """Pure-JAX reference on the padded parameters (f32 math throughout)."""
    h = state.astype(jnp.float32)
    for i, (w, b) in enumerate(params):
        h = h @ w.astype(jnp.float32) + b.astype(jnp.float32)
        if i < len(params) - 1:
            h = jnp.maximum(h, 0.0)
    return h[:, :output_dim]


if __name__ == "__main__":
    input_dim = 32
    output_dim = 4
    batch = 8

    key = jax.random.PRNGKey(0)
    key, kx = jax.random.split(key)
    state = jax.random.normal(kx, (batch, input_dim), jnp.float32)

    # --- f32 path: bit-tight correctness check --------------------------------
    params_f32 = init_dqn_params(key, input_dim, output_dim, dtype=jnp.float32)
    qvals = dqn_forward(state, params_f32, output_dim)
    qvals = jax.block_until_ready(qvals)

    ref = dqn_reference(state, params_f32, output_dim)
    assert qvals.shape == (batch, output_dim)
    assert qvals.dtype == jnp.float32
    assert jnp.allclose(qvals, ref, atol=1e-4, rtol=1e-4), "f32 mismatch vs reference"

    # --- bf16 path (default for throughput): looser tolerance -----------------
    params_bf16 = init_dqn_params(key, input_dim, output_dim, dtype=jnp.bfloat16)
    qvals_bf16 = dqn_forward(state, params_bf16, output_dim)
    qvals_bf16 = jax.block_until_ready(qvals_bf16)

    ref_bf16 = dqn_reference(state, params_bf16, output_dim)
    assert qvals_bf16.shape == (batch, output_dim)
    assert jnp.allclose(qvals_bf16.astype(jnp.float32), ref_bf16,
                        atol=5e-2, rtol=5e-2), "bf16 mismatch vs reference"

    print("KERNEL_OK")
</pallas_src>

<mosaic_0001>
module attributes {stable_mosaic.version = 11 : i64} {
  func.func @dqn_kernel(%arg0: i32, %arg1: memref<8x32xf32, #tpu.memory_space<vmem>>, %arg2: memref<32x128xf32, #tpu.memory_space<vmem>>, %arg3: memref<1x128xf32, #tpu.memory_space<vmem>>, %arg4: memref<128x256xf32, #tpu.memory_space<vmem>>, %arg5: memref<1x256xf32, #tpu.memory_space<vmem>>, %arg6: memref<256x128xf32, #tpu.memory_space<vmem>>, %arg7: memref<1x128xf32, #tpu.memory_space<vmem>>, %arg8: memref<128x128xf32, #tpu.memory_space<vmem>>, %arg9: memref<1x128xf32, #tpu.memory_space<vmem>>, %arg10: memref<8x128xf32, #tpu.memory_space<vmem>>) attributes {dimension_semantics = [#tpu.dimension_semantics<parallel>], iteration_bounds = array<i64: 2>, scalar_prefetch = 0 : i64, scratch_operands = 0 : i64, tpu.core_type = #tpu.core_type<tc>, window_params = [{transform_indices = @transform_0, window_bounds = array<i64: 8, 32>}, {pipeline_mode = #tpu.pipeline_mode<synchronous>, transform_indices = @transform_1, window_bounds = array<i64: 32, 128>}, {pipeline_mode = #tpu.pipeline_mode<synchronous>, transform_indices = @transform_2, window_bounds = array<i64: 1, 128>}, {pipeline_mode = #tpu.pipeline_mode<synchronous>, transform_indices = @transform_3, window_bounds = array<i64: 128, 256>}, {pipeline_mode = #tpu.pipeline_mode<synchronous>, transform_indices = @transform_4, window_bounds = array<i64: 1, 256>}, {pipeline_mode = #tpu.pipeline_mode<synchronous>, transform_indices = @transform_5, window_bounds = array<i64: 256, 128>}, {pipeline_mode = #tpu.pipeline_mode<synchronous>, transform_indices = @transform_6, window_bounds = array<i64: 1, 128>}, {pipeline_mode = #tpu.pipeline_mode<synchronous>, transform_indices = @transform_7, window_bounds = array<i64: 128, 128>}, {pipeline_mode = #tpu.pipeline_mode<synchronous>, transform_indices = @transform_8, window_bounds = array<i64: 1, 128>}, {transform_indices = @transform_9, window_bounds = array<i64: 8, 128>}]} {
    %c0 = arith.constant 0 : index
    %c0_0 = arith.constant 0 : index
    %0 = vector.load %arg1[%c0, %c0_0] : memref<8x32xf32, #tpu.memory_space<vmem>>, vector<8x32xf32>
    %c0_1 = arith.constant 0 : index
    %c0_2 = arith.constant 0 : index
    %1 = vector.load %arg2[%c0_1, %c0_2] : memref<32x128xf32, #tpu.memory_space<vmem>>, vector<32x128xf32>
    %cst = arith.constant dense<0.000000e+00> : vector<8x128xf32>
    %2 = tpu.matmul %0, %1, %cst {dimension_numbers = #tpu.dot_dimension_numbers<[1], [0], [0], [1], [0, 0, 1, 1], [], []>} : vector<8x32xf32>, vector<32x128xf32>, vector<8x128xf32> -> vector<8x128xf32>
    %c0_3 = arith.constant 0 : index
    %c0_4 = arith.constant 0 : index
    %3 = vector.load %arg3[%c0_3, %c0_4] : memref<1x128xf32, #tpu.memory_space<vmem>>, vector<1x128xf32>
    %4 = vector.broadcast %3 : vector<1x128xf32> to vector<8x128xf32>
    %5 = arith.addf %2, %4 : vector<8x128xf32>
    %cst_5 = arith.constant 0.000000e+00 : f32
    %6 = vector.broadcast %cst_5 : f32 to vector<8x128xf32>
    %7 = arith.maximumf %5, %6 : vector<8x128xf32>
    %c0_6 = arith.constant 0 : index
    %c0_7 = arith.constant 0 : index
    %8 = vector.load %arg4[%c0_6, %c0_7] : memref<128x256xf32, #tpu.memory_space<vmem>>, vector<128x256xf32>
    %cst_8 = arith.constant dense<0.000000e+00> : vector<8x256xf32>
    %9 = tpu.matmul %7, %8, %cst_8 {dimension_numbers = #tpu.dot_dimension_numbers<[1], [0], [0], [1], [0, 0, 1, 1], [], []>} : vector<8x128xf32>, vector<128x256xf32>, vector<8x256xf32> -> vector<8x256xf32>
    %c0_9 = arith.constant 0 : index
    %c0_10 = arith.constant 0 : index
    %10 = vector.load %arg5[%c0_9, %c0_10] : memref<1x256xf32, #tpu.memory_space<vmem>>, vector<1x256xf32>
    %11 = vector.broadcast %10 : vector<1x256xf32> to vector<8x256xf32>
    %12 = arith.addf %9, %11 : vector<8x256xf32>
    %cst_11 = arith.constant 0.000000e+00 : f32
    %13 = vector.broadcast %cst_11 : f32 to vector<8x256xf32>
    %14 = arith.maximumf %12, %13 : vector<8x256xf32>
    %c0_12 = arith.constant 0 : index
    %c0_13 = arith.constant 0 : index
    %15 = vector.load %arg6[%c0_12, %c0_13] : memref<256x128xf32, #tpu.memory_space<vmem>>, vector<256x128xf32>
    %cst_14 = arith.constant dense<0.000000e+00> : vector<8x128xf32>
    %16 = tpu.matmul %14, %15, %cst_14 {dimension_numbers = #tpu.dot_dimension_numbers<[1], [0], [0], [1], [0, 0, 1, 1], [], []>} : vector<8x256xf32>, vector<256x128xf32>, vector<8x128xf32> -> vector<8x128xf32>
    %c0_15 = arith.constant 0 : index
    %c0_16 = arith.constant 0 : index
    %17 = vector.load %arg7[%c0_15, %c0_16] : memref<1x128xf32, #tpu.memory_space<vmem>>, vector<1x128xf32>
    %18 = vector.broadcast %17 : vector<1x128xf32> to vector<8x128xf32>
    %19 = arith.addf %16, %18 : vector<8x128xf32>
    %cst_17 = arith.constant 0.000000e+00 : f32
    %20 = vector.broadcast %cst_17 : f32 to vector<8x128xf32>
    %21 = arith.maximumf %19, %20 : vector<8x128xf32>
    %c0_18 = arith.constant 0 : index
    %c0_19 = arith.constant 0 : index
    %22 = vector.load %arg8[%c0_18, %c0_19] : memref<128x128xf32, #tpu.memory_space<vmem>>, vector<128x128xf32>
    %cst_20 = arith.constant dense<0.000000e+00> : vector<8x128xf32>
    %23 = tpu.matmul %21, %22, %cst_20 {dimension_numbers = #tpu.dot_dimension_numbers<[1], [0], [0], [1], [0, 0, 1, 1], [], []>} : vector<8x128xf32>, vector<128x128xf32>, vector<8x128xf32> -> vector<8x128xf32>
    %c0_21 = arith.constant 0 : index
    %c0_22 = arith.constant 0 : index
    %24 = vector.load %arg9[%c0_21, %c0_22] : memref<1x128xf32, #tpu.memory_space<vmem>>, vector<1x128xf32>
    %25 = vector.broadcast %24 : vector<1x128xf32> to vector<8x128xf32>
    %26 = arith.addf %23, %25 : vector<8x128xf32>
    %c0_23 = arith.constant 0 : index
    %c0_24 = arith.constant 0 : index
    %27 = vector.load %arg10[%c0_23, %c0_24] : memref<8x128xf32, #tpu.memory_space<vmem>>, vector<8x128xf32>
    tpu.vector_store %arg10[%c0_23, %c0_24], %26 {strides = array<i32>} : memref<8x128xf32, #tpu.memory_space<vmem>>, vector<8x128xf32>,
    return
  }
  func.func @transform_0(%arg0: i32) -> (i32, i32) {
    %c0_i32 = arith.constant 0 : i32
    %c0_i32_0 = arith.constant 0 : i32
    return %arg0, %c0_i32 : i32, i32
  }
  func.func @transform_1(%arg0: i32) -> (i32, i32) {
    %c0_i32 = arith.constant 0 : i32
    %c0_i32_0 = arith.constant 0 : i32
    %c0_i32_1 = arith.constant 0 : i32
    return %c0_i32, %c0_i32_0 : i32, i32
  }
  func.func @transform_2(%arg0: i32) -> (i32, i32) {
    %c0_i32 = arith.constant 0 : i32
    %c0_i32_0 = arith.constant 0 : i32
    %c0_i32_1 = arith.constant 0 : i32
    return %c0_i32, %c0_i32_0 : i32, i32
  }
  func.func @transform_3(%arg0: i32) -> (i32, i32) {
    %c0_i32 = arith.constant 0 : i32
    %c0_i32_0 = arith.constant 0 : i32
    %c0_i32_1 = arith.constant 0 : i32
    return %c0_i32, %c0_i32_0 : i32, i32
  }
  func.func @transform_4(%arg0: i32) -> (i32, i32) {
    %c0_i32 = arith.constant 0 : i32
    %c0_i32_0 = arith.constant 0 : i32
    %c0_i32_1 = arith.constant 0 : i32
    return %c0_i32, %c0_i32_0 : i32, i32
  }
  func.func @transform_5(%arg0: i32) -> (i32, i32) {
    %c0_i32 = arith.constant 0 : i32
    %c0_i32_0 = arith.constant 0 : i32
    %c0_i32_1 = arith.constant 0 : i32
    return %c0_i32, %c0_i32_0 : i32, i32
  }
  func.func @transform_6(%arg0: i32) -> (i32, i32) {
    %c0_i32 = arith.constant 0 : i32
    %c0_i32_0 = arith.constant 0 : i32
    %c0_i32_1 = arith.constant 0 : i32
    return %c0_i32, %c0_i32_0 : i32, i32
  }
  func.func @transform_7(%arg0: i32) -> (i32, i32) {
    %c0_i32 = arith.constant 0 : i32
    %c0_i32_0 = arith.constant 0 : i32
    %c0_i32_1 = arith.constant 0 : i32
    return %c0_i32, %c0_i32_0 : i32, i32
  }
  func.func @transform_8(%arg0: i32) -> (i32, i32) {
    %c0_i32 = arith.constant 0 : i32
    %c0_i32_0 = arith.constant 0 : i32
    %c0_i32_1 = arith.constant 0 : i32
    return %c0_i32, %c0_i32_0 : i32, i32
  }
  func.func @transform_9(%arg0: i32) -> (i32, i32) {
    %c0_i32 = arith.constant 0 : i32
    %c0_i32_0 = arith.constant 0 : i32
    return %arg0, %c0_i32 : i32, i32
  }
}

</mosaic_0001>

<llo_original>
// kernel: dqn_forward.1
$region0: #{dqn_forward.1}
  #allocation0 [shape = 'u32[]', space=smem, size = 0x4, offset = 0x4, fixed_abs, tag = 'smem constant byte address 0x4 - core index']
  #allocation1 [shape = 'u32[72,128]{1,0:T(1,128)}', space=vmem, size = 0x9000, scoped, tag = 'internal scratch']
  %s0 = inlined_call_operand.vmem [shape: f32[16,32], index: 0, kind: input, shape index: {}]
  %s1 = inlined_call_operand.hbm [shape: f32[32,128], index: 1, kind: input, shape index: {}]
  %s2 = inlined_call_operand.vmem [shape: f32[1,128], index: 2, kind: input, shape index: {}]
  %s3 = inlined_call_operand.hbm [shape: f32[128,256], index: 3, kind: input, shape index: {}]
  %s4 = inlined_call_operand.vmem [shape: f32[1,256], index: 4, kind: input, shape index: {}]
  %s5 = inlined_call_operand.hbm [shape: f32[256,128], index: 5, kind: input, shape index: {}]
  %s6 = inlined_call_operand.vmem [shape: f32[1,128], index: 6, kind: input, shape index: {}]
  %s7 = inlined_call_operand.hbm [shape: f32[128,128], index: 7, kind: input, shape index: {}]
  %s8 = inlined_call_operand.vmem [shape: f32[1,128], index: 8, kind: input, shape index: {}]
  %s9 = inlined_call_operand.vmem [shape: f32[16,128], index: 9, kind: output, shape index: {}]
  %s10 = sld [smem:[#allocation0]]
  $region85: #{dqn_forward.1} parent=0
    _
  %s12 = ssub.s32 1, %s10
  %s13 = scalar_select 0, %s12, %s10
  $region1: #{dqn_forward.1} parent=0
    #allocation2 [shape = 'u8[16384]{0}', space=vmem, size = 0x4000, scoped, tag = 'input window, operand 1, single buffered']
    #allocation3 [shape = 's32[2]{0}', space=sflag, size = 0x8, scoped, tag = 'scoped memory for dqn_forward.1']
    #allocation4 [shape = 'u8[131072]{0}', space=vmem, size = 0x20000, scoped, tag = 'input window, operand 3, single buffered']
    #allocation5 [shape = 's32[1]{0}', space=sflag, size = 0x4, scoped, tag = 'scoped memory for dqn_forward.1']
    #allocation6 [shape = 'u8[131072]{0}', space=vmem, size = 0x20000, scoped, tag = 'input window, operand 5, single buffered']
    #allocation7 [shape = 'u8[65536]{0}', space=vmem, size = 0x10000, scoped, tag = 'input window, operand 7, single buffered']
    #allocation8 [shape = 's32[1]{0}', space=sflag, size = 0x4, scoped, tag = 'scoped memory for dqn_forward.1']
    %14 = vsyncpa [#allocation3], 0
    %15 = vsyncpa [#allocation5], 0
    %16 = vsyncpa [#allocation8], 0
    loop: start=0, step=1, limit=4
    $region2: #{dqn_forward.1} parent=1 // loop_pre_header
      _
    $region3: #{dqn_forward.1} parent=1 // loop_header
      %s18 = sphi 0, %s22
      %p19 = scmp.ge.s32.totalorder %s18, 4
      %s28 = sphi 0, %s30
      %s31 = sphi 0, %s28
      %s32 = sphi 0, %s31
      %s48 = sphi 0, %s32
      %s52 = sphi 0, %s52
      %s54 = sphi 0, %s52
      %s55 = sphi 0, %s54
      %s69 = sphi 0, %s55
      %s73 = sphi 0, %s73
      %s75 = sphi 0, %s73
      %s76 = sphi 0, %s75
      %s90 = sphi 0, %s76
      %s94 = sphi 0, %s94
      %s96 = sphi 0, %s94
      %s97 = sphi 0, %s96
      %s111 = sphi 0, %s97
      %s115 = sphi 0, %s115
      %s117 = sphi 0, %s115
      %s118 = sphi 0, %s117
      %s132 = sphi 0, %s118
      %s136 = sphi 0, %s136
      %s138 = sphi 0, %s136
      %s139 = sphi 0, %s138
      %s153 = sphi 0, %s139
      %s157 = sphi 0, %s157
      %s159 = sphi 0, %s157
      %s160 = sphi 0, %s159
      %s174 = sphi 0, %s160
      %s178 = sphi 0, %s178
      %s180 = sphi 0, %s178
      %s181 = sphi 0, %s180
      %s195 = sphi 0, %s181
      %s199 = sphi 0, %s199
      %s201 = sphi 0, %s199
      %s202 = sphi 0, %s201
      %s216 = sphi 0, %s202
      %s222 = sphi 0, %s224
      %s225 = sphi 0, %s222
      %s226 = sphi 0, %s225
      %s242 = sphi 0, %s226
    $region4: #{dqn_forward.1} parent=1 // loop_header_branch
      %21 = sbr.rel (%p19) target = $region8
    $region5: #{dqn_forward.1} parent=1 // loop_body
      %s23 = ssub.s32 %s18, 1
      %s24 = ssub.s32 %s18, 2
      %s25 = sadd.s32 %s18, 1
      %s26 = ssub.s32 %s18, %s25
      %p27 = scmp.eq.s32.totalorder %s26, 0
      %s29 = sadd.s32 %s28, 1
      %s30 = scalar_select %p27, %s28, %s29
      %p33 = pneg %p27
      %p34 = scmp.eq.s32.totalorder %s18, 1
      %p35 = por %p33, %p34
      %p36 = scmp.ne.s32.totalorder %s28, %s31
      %p37 = scmp.eq.s32.totalorder %s18, 0
      %p38 = por %p36, %p37
      %p39 = scmp.ne.s32.totalorder %s28, %s31
      %p40 = scmp.eq.s32.totalorder %s23, 1
      %p41 = por %p39, %p40
      %p42 = scmp.ne.s32.totalorder %s31, %s32
      %p43 = scmp.eq.s32.totalorder %s23, 0
      %p44 = por %p42, %p43
      %p45 = scmp.ne.s32.totalorder %s31, %s32
      %p46 = scmp.eq.s32.totalorder %s24, 1
      %p47 = por %p45, %p46
      %p49 = scmp.ne.s32.totalorder %s32, %s48
      %p50 = scmp.eq.s32.totalorder %s24, 0
      %p51 = por %p49, %p50
      %s53 = sadd.s32 %s52, 1
      %p56 = scmp.eq.s32.totalorder %s18, 1
      %p57 = scmp.ne.s32.totalorder %s52, %s54
      %p58 = scmp.eq.s32.totalorder %s18, 0
      %p59 = por %p57, %p58
      %p60 = scmp.ne.s32.totalorder %s52, %s54
      %p61 = scmp.eq.s32.totalorder %s23, 1
      %p62 = por %p60, %p61
      %p63 = scmp.ne.s32.totalorder %s54, %s55
      %p64 = scmp.eq.s32.totalorder %s23, 0
      %p65 = por %p63, %p64
      %p66 = scmp.ne.s32.totalorder %s54, %s55
      %p67 = scmp.eq.s32.totalorder %s24, 1
      %p68 = por %p66, %p67
      %p70 = scmp.ne.s32.totalorder %s55, %s69
      %p71 = scmp.eq.s32.totalorder %s24, 0
      %p72 = por %p70, %p71
      %s74 = sadd.s32 %s73, 1
      %p77 = scmp.eq.s32.totalorder %s18, 1
      %p78 = scmp.ne.s32.totalorder %s73, %s75
      %p79 = scmp.eq.s32.totalorder %s18, 0
      %p80 = por %p78, %p79
      %p81 = scmp.ne.s32.totalorder %s73, %s75
      %p82 = scmp.eq.s32.totalorder %s23, 1
      %p83 = por %p81, %p82
      %p84 = scmp.ne.s32.totalorder %s75, %s76
      %p85 = scmp.eq.s32.totalorder %s23, 0
      %p86 = por %p84, %p85
      %p87 = scmp.ne.s32.totalorder %s75, %s76
      %p88 = scmp.eq.s32.totalorder %s24, 1
      %p89 = por %p87, %p88
      %p91 = scmp.ne.s32.totalorder %s76, %s90
      %p92 = scmp.eq.s32.totalorder %s24, 0
      %p93 = por %p91, %p92
      %s95 = sadd.s32 %s94, 1
      %p98 = scmp.eq.s32.totalorder %s18, 1
      %p99 = scmp.ne.s32.totalorder %s94, %s96
      %p100 = scmp.eq.s32.totalorder %s18, 0
      %p101 = por %p99, %p100
      %p102 = scmp.ne.s32.totalorder %s94, %s96
      %p103 = scmp.eq.s32.totalorder %s23, 1
      %p104 = por %p102, %p103
      %p105 = scmp.ne.s32.totalorder %s96, %s97
      %p106 = scmp.eq.s32.totalorder %s23, 0
      %p107 = por %p105, %p106
      %p108 = scmp.ne.s32.totalorder %s96, %s97
      %p109 = scmp.eq.s32.totalorder %s24, 1
      %p110 = por %p108, %p109
      %p112 = scmp.ne.s32.totalorder %s97, %s111
      %p113 = scmp.eq.s32.totalorder %s24, 0
      %p114 = por %p112, %p113
      %s116 = sadd.s32 %s115, 1
      %p119 = scmp.eq.s32.totalorder %s18, 1
      %p120 = scmp.ne.s32.totalorder %s115, %s117
      %p121 = scmp.eq.s32.totalorder %s18, 0
      %p122 = por %p120, %p121
      %p123 = scmp.ne.s32.totalorder %s115, %s117
      %p124 = scmp.eq.s32.totalorder %s23, 1
      %p125 = por %p123, %p124
      %p126 = scmp.ne.s32.totalorder %s117, %s118
      %p127 = scmp.eq.s32.totalorder %s23, 0
      %p128 = por %p126, %p127
      %p129 = scmp.ne.s32.totalorder %s117, %s118
      %p130 = scmp.eq.s32.totalorder %s24, 1
      %p131 = por %p129, %p130
      %p133 = scmp.ne.s32.totalorder %s118, %s132
      %p134 = scmp.eq.s32.totalorder %s24, 0
      %p135 = por %p133, %p134
      %s137 = sadd.s32 %s136, 1
      %p140 = scmp.eq.s32.totalorder %s18, 1
      %p141 = scmp.ne.s32.totalorder %s136, %s138
      %p142 = scmp.eq.s32.totalorder %s18, 0
      %p143 = por %p141, %p142
      %p144 = scmp.ne.s32.totalorder %s136, %s138
      %p145 = scmp.eq.s32.totalorder %s23, 1
      %p146 = por %p144, %p145
      %p147 = scmp.ne.s32.totalorder %s138, %s139
      %p148 = scmp.eq.s32.totalorder %s23, 0
      %p149 = por %p147, %p148
      %p150 = scmp.ne.s32.totalorder %s138, %s139
      %p151 = scmp.eq.s32.totalorder %s24, 1
      %p152 = por %p150, %p151
      %p154 = scmp.ne.s32.totalorder %s139, %s153
      %p155 = scmp.eq.s32.totalorder %s24, 0
      %p156 = por %p154, %p155
      %s158 = sadd.s32 %s157, 1
      %p161 = scmp.eq.s32.totalorder %s18, 1
      %p162 = scmp.ne.s32.totalorder %s157, %s159
      %p163 = scmp.eq.s32.totalorder %s18, 0
      %p164 = por %p162, %p163
      %p165 = scmp.ne.s32.totalorder %s157, %s159
      %p166 = scmp.eq.s32.totalorder %s23, 1
      %p167 = por %p165, %p166
      %p168 = scmp.ne.s32.totalorder %s159, %s160
      %p169 = scmp.eq.s32.totalorder %s23, 0
      %p170 = por %p168, %p169
      %p171 = scmp.ne.s32.totalorder %s159, %s160
      %p172 = scmp.eq.s32.totalorder %s24, 1
      %p173 = por %p171, %p172
      %p175 = scmp.ne.s32.totalorder %s160, %s174
      %p176 = scmp.eq.s32.totalorder %s24, 0
      %p177 = por %p175, %p176
      %s179 = sadd.s32 %s178, 1
      %p182 = scmp.eq.s32.totalorder %s18, 1
      %p183 = scmp.ne.s32.totalorder %s178, %s180
      %p184 = scmp.eq.s32.totalorder %s18, 0
      %p185 = por %p183, %p184
      %p186 = scmp.ne.s32.totalorder %s178, %s180
      %p187 = scmp.eq.s32.totalorder %s23, 1
      %p188 = por %p186, %p187
      %p189 = scmp.ne.s32.totalorder %s180, %s181
      %p190 = scmp.eq.s32.totalorder %s23, 0
      %p191 = por %p189, %p190
      %p192 = scmp.ne.s32.totalorder %s180, %s181
      %p193 = scmp.eq.s32.totalorder %s24, 1
      %p194 = por %p192, %p193
      %p196 = scmp.ne.s32.totalorder %s181, %s195
      %p197 = scmp.eq.s32.totalorder %s24, 0
      %p198 = por %p196, %p197
      %s200 = sadd.s32 %s199, 1
      %p203 = scmp.eq.s32.totalorder %s18, 1
      %p204 = scmp.ne.s32.totalorder %s199, %s201
      %p205 = scmp.eq.s32.totalorder %s18, 0
      %p206 = por %p204, %p205
      %p207 = scmp.ne.s32.totalorder %s199, %s201
      %p208 = scmp.eq.s32.totalorder %s23, 1
      %p209 = por %p207, %p208
      %p210 = scmp.ne.s32.totalorder %s201, %s202
      %p211 = scmp.eq.s32.totalorder %s23, 0
      %p212 = por %p210, %p211
      %p213 = scmp.ne.s32.totalorder %s201, %s202
      %p214 = scmp.eq.s32.totalorder %s24, 1
      %p215 = por %p213, %p214
      %p217 = scmp.ne.s32.totalorder %s202, %s216
      %p218 = scmp.eq.s32.totalorder %s24, 0
      %p219 = por %p217, %p218
      %s220 = ssub.s32 %s18, %s25
      %p221 = scmp.eq.s32.totalorder %s220, 0
      %s223 = sadd.s32 %s222, 1
      %s224 = scalar_select %p221, %s222, %s223
      %p227 = pneg %p221
      %p228 = scmp.eq.s32.totalorder %s18, 1
      %p229 = por %p227, %p228
      %p230 = scmp.ne.s32.totalorder %s222, %s225
      %p231 = scmp.eq.s32.totalorder %s18, 0
      %p232 = por %p230, %p231
      %p233 = scmp.ne.s32.totalorder %s222, %s225
      %p234 = scmp.eq.s32.totalorder %s23, 1
      %p235 = por %p233, %p234
      %p236 = scmp.ne.s32.totalorder %s225, %s226
      %p237 = scmp.eq.s32.totalorder %s23, 0
      %p238 = por %p236, %p237
      %p239 = scmp.ne.s32.totalorder %s225, %s226
      %p240 = scmp.eq.s32.totalorder %s24, 1
      %p241 = por %p239, %p240
      %p243 = scmp.ne.s32.totalorder %s226, %s242
      %p244 = scmp.eq.s32.totalorder %s24, 0
      %p245 = por %p243, %p244
      %p246 = scmp.le.s32.totalorder 1, %s18
      %p247 = scmp.lt.s32.totalorder %s18, 3
      %p248 = pnand %p246, %p247
      %p249 = pneg %p248
      // Predicated region
      $region9: #{dqn_forward.1} parent=5 // pred_check
        _
      $region10: #{dqn_forward.1} parent=5 // pred_check_branch
        %251 = sbr.rel (%p248) target = $region12
      $region11: #{dqn_forward.1} parent=5 // pred_region
        %s252 = ssub.s32 %s18, 1
        // Predicated region
        $region13: #{dqn_forward.1} parent=11 // pred_check
          %p253 = pneg %p65
        $region14: #{dqn_forward.1} parent=11 // pred_check_branch
          %255 = sbr.rel (%p253) target = $region16
        $region15: #{dqn_forward.1} parent=11 // pred_region
          %257 = vsyncadd [#allocation3], 0
          %s258 = sshll.u32 %s1, 4
          %s259 = int_to_ptr.hbm [resolvable:$true] %s258
          %s260 = sshll.u32 [#allocation2], 4
          %s261 = int_to_ptr.vmem [resolvable:$true] %s260
          %266 = dma.hbm_to_vmem [thread:$0]  %s259, 512, %s261, [#allocation3], 128, 128, 8
        $region16: #{dqn_forward.1} parent=11 // pred_fallthru
          _
        // Predicated region
        $region17: #{dqn_forward.1} parent=11 // pred_check
          %p267 = pneg %p86
        $region18: #{dqn_forward.1} parent=11 // pred_check_branch
          %269 = sbr.rel (%p267) target = $region20
        $region19: #{dqn_forward.1} parent=11 // pred_region
          _
        $region20: #{dqn_forward.1} parent=11 // pred_fallthru
          _
        // Predicated region
        $region21: #{dqn_forward.1} parent=11 // pred_check
          %p270 = pneg %p107
        $region22: #{dqn_forward.1} parent=11 // pred_check_branch
          %272 = sbr.rel (%p270) target = $region24
        $region23: #{dqn_forward.1} parent=11 // pred_region
          %274 = vsyncadd [#allocation5], 0
          %s275 = sshll.u32 %s3, 4
          %s276 = int_to_ptr.hbm [resolvable:$true] %s275
          %s277 = sshll.u32 [#allocation4], 4
          %s278 = int_to_ptr.vmem [resolvable:$true] %s277
          %283 = dma.hbm_to_vmem [thread:$0]  %s276, 4096, %s278, [#allocation5], 256, 256, 16
        $region24: #{dqn_forward.1} parent=11 // pred_fallthru
          _
        // Predicated region
        $region25: #{dqn_forward.1} parent=11 // pred_check
          %p284 = pneg %p128
        $region26: #{dqn_forward.1} parent=11 // pred_check_branch
          %286 = sbr.rel (%p284) target = $region28
        $region27: #{dqn_forward.1} parent=11 // pred_region
          _
        $region28: #{dqn_forward.1} parent=11 // pred_fallthru
          _
        // Predicated region
        $region29: #{dqn_forward.1} parent=11 // pred_check
          %p287 = pneg %p149
        $region30: #{dqn_forward.1} parent=11 // pred_check_branch
          %289 = sbr.rel (%p287) target = $region32
        $region31: #{dqn_forward.1} parent=11 // pred_region
          %291 = vsyncadd [#allocation5], 0
          %s292 = sshll.u32 %s5, 4
          %s293 = int_to_ptr.hbm [resolvable:$true] %s292
          %s294 = sshll.u32 [#allocation6], 4
          %s295 = int_to_ptr.vmem [resolvable:$true] %s294
          %300 = dma.hbm_to_vmem [thread:$0]  %s293, 4096, %s295, [#allocation5], 128, 128, 8
        $region32: #{dqn_forward.1} parent=11 // pred_fallthru
          _
        // Predicated region
        $region33: #{dqn_forward.1} parent=11 // pred_check
          %p301 = pneg %p170
        $region34: #{dqn_forward.1} parent=11 // pred_check_branch
          %303 = sbr.rel (%p301) target = $region36
        $region35: #{dqn_forward.1} parent=11 // pred_region
          _
        $region36: #{dqn_forward.1} parent=11 // pred_fallthru
          _
        // Predicated region
        $region37: #{dqn_forward.1} parent=11 // pred_check
          %p304 = pneg %p191
        $region38: #{dqn_forward.1} parent=11 // pred_check_branch
          %306 = sbr.rel (%p304) target = $region40
        $region39: #{dqn_forward.1} parent=11 // pred_region
          %308 = vsyncadd [#allocation8], 0
          %s309 = sshll.u32 %s7, 4
          %s310 = int_to_ptr.hbm [resolvable:$true] %s309
          %s311 = sshll.u32 [#allocation7], 4
          %s312 = int_to_ptr.vmem [resolvable:$true] %s311
          %317 = dma.hbm_to_vmem [thread:$0]  %s310, 2048, %s312, [#allocation8], 128, 128, 8
        $region40: #{dqn_forward.1} parent=11 // pred_fallthru
          _
        // Predicated region
        $region41: #{dqn_forward.1} parent=11 // pred_check
          %p318 = pneg %p212
        $region42: #{dqn_forward.1} parent=11 // pred_check_branch
          %320 = sbr.rel (%p318) target = $region44
        $region43: #{dqn_forward.1} parent=11 // pred_region
          _
        $region44: #{dqn_forward.1} parent=11 // pred_fallthru
          _
      $region12: #{dqn_forward.1} parent=5 // pred_fallthru
        _
      %p321 = scmp.lt.s32.totalorder %s18, 2
      // Predicated region
      $region45: #{dqn_forward.1} parent=5 // pred_check
        %p322 = pneg %p321
      $region46: #{dqn_forward.1} parent=5 // pred_check_branch
        %324 = sbr.rel (%p322) target = $region48
      $region47: #{dqn_forward.1} parent=5 // pred_region
        // Predicated region
        $region49: #{dqn_forward.1} parent=47 // pred_check
          %p325 = pneg %p38
        $region50: #{dqn_forward.1} parent=47 // pred_check_branch
          %327 = sbr.rel (%p325) target = $region52
        $region51: #{dqn_forward.1} parent=47 // pred_region
          %p328 = scmp.lt.s32.totalorder %s18, 1
          %s329 = scalar_select %p328, %s18, 1
          %s330 = smul.addr %s329, 8
          %s331 = scalar_lea.vmem %s0, %s330
        $region52: #{dqn_forward.1} parent=47 // pred_fallthru
          _
      $region48: #{dqn_forward.1} parent=5 // pred_fallthru
        _
      %p332 = scmp.le.s32.totalorder 1, %s18
      %p333 = scmp.lt.s32.totalorder %s18, 3
      %p334 = pnand %p332, %p333
      %p335 = pneg %p334
      // Predicated region
      $region53: #{dqn_forward.1} parent=5 // pred_check
        _
      $region54: #{dqn_forward.1} parent=5 // pred_check_branch
        %337 = sbr.rel (%p334) target = $region56
      $region55: #{dqn_forward.1} parent=5 // pred_region
        %s338 = ssub.s32 %s18, 1
        // Predicated region
        $region57: #{dqn_forward.1} parent=55 // pred_check
          %p339 = pneg %p65
        $region58: #{dqn_forward.1} parent=55 // pred_check_branch
          %341 = sbr.rel (%p339) target = $region60
        $region59: #{dqn_forward.1} parent=55 // pred_region
          %343 = dma.done [#allocation3], 512
        $region60: #{dqn_forward.1} parent=55 // pred_fallthru
          _
        // Predicated region
        $region61: #{dqn_forward.1} parent=55 // pred_check
          %p344 = pneg %p107
        $region62: #{dqn_forward.1} parent=55 // pred_check_branch
          %346 = sbr.rel (%p344) target = $region64
        $region63: #{dqn_forward.1} parent=55 // pred_region
          %348 = dma.done [#allocation5], 4096
        $region64: #{dqn_forward.1} parent=55 // pred_fallthru
          _
        // Predicated region
        $region65: #{dqn_forward.1} parent=55 // pred_check
          %p349 = pneg %p149
        $region66: #{dqn_forward.1} parent=55 // pred_check_branch
          %351 = sbr.rel (%p349) target = $region68
        $region67: #{dqn_forward.1} parent=55 // pred_region
          %353 = dma.done [#allocation5], 4096
        $region68: #{dqn_forward.1} parent=55 // pred_fallthru
          _
        // Predicated region
        $region69: #{dqn_forward.1} parent=55 // pred_check
          %p354 = pneg %p191
        $region70: #{dqn_forward.1} parent=55 // pred_check_branch
          %356 = sbr.rel (%p354) target = $region72
        $region71: #{dqn_forward.1} parent=55 // pred_region
          %358 = dma.done [#allocation8], 2048
        $region72: #{dqn_forward.1} parent=55 // pred_fallthru
          _
        %p359 = scmp.lt.s32.totalorder %s23, 1
        %s360 = scalar_select %p359, %s23, 1
        %s361 = smul.addr %s360, 8
        %s362 = scalar_lea.vmem %s0, %s361
        %p363 = pneg %p44
        %p364 = pneg %p41
        %p365 = pneg %p65
        %p366 = pneg %p62
        %p367 = pneg %p86
        %p368 = pneg %p83
        %p369 = pneg %p107
        %p370 = pneg %p104
        %p371 = pneg %p128
        %p372 = pneg %p125
        %p373 = pneg %p149
        %p374 = pneg %p146
        %p375 = pneg %p170
        %p376 = pneg %p167
        %p377 = pneg %p191
        %p378 = pneg %p188
        %p379 = pneg %p212
        %p380 = pneg %p209
        %p381 = pneg %p238
        %p382 = pneg %p235
        %p383 = scmp.lt.s32.totalorder %s23, 1
        %s384 = scalar_select %p383, %s23, 1
        %s385 = smul.addr %s384, 8
        %s386 = scalar_lea.vmem %s9, %s385
        %p387 = scmp.lt.s32.totalorder %s23, 1
        %s388 = scalar_select %p387, %s23, 1
        %s389 = smul.addr %s388, 8
        %s390 = scalar_lea.vmem %s0, %s389
        %p391 = scmp.lt.s32.totalorder %s23, 1
        %s392 = scalar_select %p391, %s23, 1
        %s393 = smul.addr %s392, 8
        %s394 = scalar_lea.vmem %s9, %s393
        %v395 = vld [vmem:[%s390] sm:$0xff]
        %v396 = vld [vmem:[#allocation2] sm:$0xff]
        %v397 = vld [vmem:[#allocation2 + $0x8] sm:$0xff]
        %v398 = vld [vmem:[#allocation2 + $0x10] sm:$0xff]
        %v399 = vld [vmem:[#allocation2 + $0x18] sm:$0xff]
        %v400 = vld [vmem:[%s2] sm:$0x1]
        %v402 = vperm.slane %v400, 0
        %vm404 = vcmask 261120
        %v406 = vsel %vm404, %v395, 0
        %408 = vmatpush.msra.mxu0 0.0
        %409 = vmatpush.msra.mxu0 0.0
        %410 = vmatpush.msra.mxu0 0.0
        %411 = vmatpush.msra.mxu0 0.0
        %412 = vmatpush.msra.mxu0 0.0
        %413 = vmatpush.msra.mxu0 0.0
        %414 = vmatpush.msra.mxu0 0.0
        %415 = vmatpush.msra.mxu0 0.0
        %416 = vmatpush.msra.mxu0 0.0
        %417 = vmatpush.msra.mxu0 0.0
        %418 = vmatpush.msra.mxu0 0.0
        %419 = vmatpush.msra.mxu0 0.0
        %420 = vmatpush.msra.mxu0 %v399
        %421 = vmatpush.msra.mxu0 %v398
        %422 = vmatpush.msra.mxu0 %v397
        %423 = vmatpush.msra.mxu0 %v396
        %424 = vmatmul.f32.gmra.mxu0 %v406
        %v425 = vpop.f32.mrf.mxu0
        %v426 = vadd.f32 %v402, %v425
        %427 = vdwg.mxu0
        %v428 = vmax.f32 %v426, 0.0
        %v429 = vld [vmem:[#allocation4] sm:$0xff]
        %v430 = vld [vmem:[#allocation4 + $0x8] sm:$0xff]
        %v431 = vld [vmem:[#allocation4 + $0x10] sm:$0xff]
        %v432 = vld [vmem:[#allocation4 + $0x18] sm:$0xff]
        %v433 = vld [vmem:[#allocation4 + $0x20] sm:$0xff]
        %v434 = vld [vmem:[#allocation4 + $0x28] sm:$0xff]
        %v435 = vld [vmem:[#allocation4 + $0x30] sm:$0xff]
        %v436 = vld [vmem:[#allocation4 + $0x38] sm:$0xff]
        %v437 = vld [vmem:[#allocation4 + $0x40] sm:$0xff]
        %v438 = vld [vmem:[#allocation4 + $0x48] sm:$0xff]
        %v439 = vld [vmem:[#allocation4 + $0x50] sm:$0xff]
        %v440 = vld [vmem:[#allocation4 + $0x58] sm:$0xff]
        %v441 = vld [vmem:[#allocation4 + $0x60] sm:$0xff]
        %v442 = vld [vmem:[#allocation4 + $0x68] sm:$0xff]
        %v443 = vld [vmem:[#allocation4 + $0x70] sm:$0xff]
        %v444 = vld [vmem:[#allocation4 + $0x78] sm:$0xff]
        %v445 = vld [vmem:[#allocation4 + $0x80] sm:$0xff]
        %v446 = vld [vmem:[#allocation4 + $0x88] sm:$0xff]
        %v447 = vld [vmem:[#allocation4 + $0x90] sm:$0xff]
        %v448 = vld [vmem:[#allocation4 + $0x98] sm:$0xff]
        %v449 = vld [vmem:[#allocation4 + $0xa0] sm:$0xff]
        %v450 = vld [vmem:[#allocation4 + $0xa8] sm:$0xff]
        %v451 = vld [vmem:[#allocation4 + $0xb0] sm:$0xff]
        %v452 = vld [vmem:[#allocation4 + $0xb8] sm:$0xff]
        %v453 = vld [vmem:[#allocation4 + $0xc0] sm:$0xff]
        %v454 = vld [vmem:[#allocation4 + $0xc8] sm:$0xff]
        %v455 = vld [vmem:[#allocation4 + $0xd0] sm:$0xff]
        %v456 = vld [vmem:[#allocation4 + $0xd8] sm:$0xff]
        %v457 = vld [vmem:[#allocation4 + $0xe0] sm:$0xff]
        %v458 = vld [vmem:[#allocation4 + $0xe8] sm:$0xff]
        %v459 = vld [vmem:[#allocation4 + $0xf0] sm:$0xff]
        %v460 = vld [vmem:[#allocation4 + $0xf8] sm:$0xff]
        %v461 = vld [vmem:[%s4] sm:$0x3]
        %v463 = vperm.slane %v461, 0
        %v464 = vperm.slane %v461, 1
        %467 = vmatpush.msra.mxu0 %v459
        %468 = vmatpush.msra.mxu0 %v457
        %469 = vmatpush.msra.mxu0 %v455
        %470 = vmatpush.msra.mxu0 %v453
        %471 = vmatpush.msra.mxu0 %v451
        %472 = vmatpush.msra.mxu0 %v449
        %473 = vmatpush.msra.mxu0 %v447
        %474 = vmatpush.msra.mxu0 %v445
        %475 = vmatpush.msra.mxu0 %v443
        %476 = vmatpush.msra.mxu0 %v441
        %477 = vmatpush.msra.mxu0 %v439
        %478 = vmatpush.msra.mxu0 %v437
        %479 = vmatpush.msra.mxu0 %v435
        %480 = vmatpush.msra.mxu0 %v433
        %481 = vmatpush.msra.mxu0 %v431
        %482 = vmatpush.msra.mxu0 %v429
        %483 = vmatmul.f32.gmra.mxu0 %v428
        %v484 = vpop.f32.mrf.mxu0
        %v485 = vadd.f32 %v463, %v484
        %486 = vdwg.mxu0
        %487 = vmatpush.msra.mxu0 %v460
        %488 = vmatpush.msra.mxu0 %v458
        %489 = vmatpush.msra.mxu0 %v456
        %490 = vmatpush.msra.mxu0 %v454
        %491 = vmatpush.msra.mxu0 %v452
        %492 = vmatpush.msra.mxu0 %v450
        %493 = vmatpush.msra.mxu0 %v448
        %494 = vmatpush.msra.mxu0 %v446
        %495 = vmatpush.msra.mxu0 %v444
        %496 = vmatpush.msra.mxu0 %v442
        %497 = vmatpush.msra.mxu0 %v440
        %498 = vmatpush.msra.mxu0 %v438
        %499 = vmatpush.msra.mxu0 %v436
        %500 = vmatpush.msra.mxu0 %v434
        %501 = vmatpush.msra.mxu0 %v432
        %502 = vmatpush.msra.mxu0 %v430
        %503 = vmatmul.f32.gmra.mxu0 %v428
        %v504 = vpop.f32.mrf.mxu0
        %v505 = vadd.f32 %v464, %v504
        %506 = vdwg.mxu0
        %v507 = vmax.f32 %v485, 0.0
        %v508 = vmax.f32 %v505, 0.0
        %v509 = vld [vmem:[#allocation6] sm:$0xff]
        %v510 = vld [vmem:[#allocation6 + $0x8] sm:$0xff]
        %v511 = vld [vmem:[#allocation6 + $0x10] sm:$0xff]
        %v512 = vld [vmem:[#allocation6 + $0x18] sm:$0xff]
        %v513 = vld [vmem:[#allocation6 + $0x20] sm:$0xff]
        %v514 = vld [vmem:[#allocation6 + $0x28] sm:$0xff]
        %v515 = vld [vmem:[#allocation6 + $0x30] sm:$0xff]
        %v516 = vld [vmem:[#allocation6 + $0x38] sm:$0xff]
        %v517 = vld [vmem:[#allocation6 + $0x40] sm:$0xff]
        %v518 = vld [vmem:[#allocation6 + $0x48] sm:$0xff]
        %v519 = vld [vmem:[#allocation6 + $0x50] sm:$0xff]
        %v520 = vld [vmem:[#allocation6 + $0x58] sm:$0xff]
        %v521 = vld [vmem:[#allocation6 + $0x60] sm:$0xff]
        %v522 = vld [vmem:[#allocation6 + $0x68] sm:$0xff]
        %v523 = vld [vmem:[#allocation6 + $0x70] sm:$0xff]
        %v524 = vld [vmem:[#allocation6 + $0x78] sm:$0xff]
        %v525 = vld [vmem:[#allocation6 + $0x80] sm:$0xff]
        %v526 = vld [vmem:[#allocation6 + $0x88] sm:$0xff]
        %v527 = vld [vmem:[#allocation6 + $0x90] sm:$0xff]
        %v528 = vld [vmem:[#allocation6 + $0x98] sm:$0xff]
        %v529 = vld [vmem:[#allocation6 + $0xa0] sm:$0xff]
        %v530 = vld [vmem:[#allocation6 + $0xa8] sm:$0xff]
        %v531 = vld [vmem:[#allocation6 + $0xb0] sm:$0xff]
        %v532 = vld [vmem:[#allocation6 + $0xb8] sm:$0xff]
        %v533 = vld [vmem:[#allocation6 + $0xc0] sm:$0xff]
        %v534 = vld [vmem:[#allocation6 + $0xc8] sm:$0xff]
        %v535 = vld [vmem:[#allocation6 + $0xd0] sm:$0xff]
        %v536 = vld [vmem:[#allocation6 + $0xd8] sm:$0xff]
        %v537 = vld [vmem:[#allocation6 + $0xe0] sm:$0xff]
        %v538 = vld [vmem:[#allocation6 + $0xe8] sm:$0xff]
        %v539 = vld [vmem:[#allocation6 + $0xf0] sm:$0xff]
        %v540 = vld [vmem:[#allocation6 + $0xf8] sm:$0xff]
        %v541 = vld [vmem:[%s6] sm:$0x1]
        %v543 = vperm.slane %v541, 0
        %545 = vmatpush.msra.mxu0 %v524
        %546 = vmatpush.msra.mxu0 %v523
        %547 = vmatpush.msra.mxu0 %v522
        %548 = vmatpush.msra.mxu0 %v521
        %549 = vmatpush.msra.mxu0 %v520
        %550 = vmatpush.msra.mxu0 %v519
        %551 = vmatpush.msra.mxu0 %v518
        %552 = vmatpush.msra.mxu0 %v517
        %553 = vmatpush.msra.mxu0 %v516
        %554 = vmatpush.msra.mxu0 %v515
        %555 = vmatpush.msra.mxu0 %v514
        %556 = vmatpush.msra.mxu0 %v513
        %557 = vmatpush.msra.mxu0 %v512
        %558 = vmatpush.msra.mxu0 %v511
        %559 = vmatpush.msra.mxu0 %v510
        %560 = vmatpush.msra.mxu0 %v509
        %561 = vmatmul.f32.gmra.mxu0 %v507
        %v562 = vpop.f32.mrf.mxu0
        %v563 = vadd.f32 %v543, %v562
        %564 = vdwg.mxu0
        %565 = vmatpush.msra.mxu0 %v540
        %566 = vmatpush.msra.mxu0 %v539
        %567 = vmatpush.msra.mxu0 %v538
        %568 = vmatpush.msra.mxu0 %v537
        %569 = vmatpush.msra.mxu0 %v536
        %570 = vmatpush.msra.mxu0 %v535
        %571 = vmatpush.msra.mxu0 %v534
        %572 = vmatpush.msra.mxu0 %v533
        %573 = vmatpush.msra.mxu0 %v532
        %574 = vmatpush.msra.mxu0 %v531
        %575 = vmatpush.msra.mxu0 %v530
        %576 = vmatpush.msra.mxu0 %v529
        %577 = vmatpush.msra.mxu0 %v528
        %578 = vmatpush.msra.mxu0 %v527
        %579 = vmatpush.msra.mxu0 %v526
        %580 = vmatpush.msra.mxu0 %v525
        %581 = vmatmul.f32.gmra.mxu0 %v508
        %v582 = vpop.f32.mrf.mxu0
        %v583 = vadd.f32 %v563, %v582
        %584 = vdwg.mxu0
        %v585 = vmax.f32 %v583, 0.0
        %v586 = vld [vmem:[#allocation7] sm:$0xff]
        %v587 = vld [vmem:[#allocation7 + $0x8] sm:$0xff]
        %v588 = vld [vmem:[#allocation7 + $0x10] sm:$0xff]
        %v589 = vld [vmem:[#allocation7 + $0x18] sm:$0xff]
        %v590 = vld [vmem:[#allocation7 + $0x20] sm:$0xff]
        %v591 = vld [vmem:[#allocation7 + $0x28] sm:$0xff]
        %v592 = vld [vmem:[#allocation7 + $0x30] sm:$0xff]
        %v593 = vld [vmem:[#allocation7 + $0x38] sm:$0xff]
        %v594 = vld [vmem:[#allocation7 + $0x40] sm:$0xff]
        %v595 = vld [vmem:[#allocation7 + $0x48] sm:$0xff]
        %v596 = vld [vmem:[#allocation7 + $0x50] sm:$0xff]
        %v597 = vld [vmem:[#allocation7 + $0x58] sm:$0xff]
        %v598 = vld [vmem:[#allocation7 + $0x60] sm:$0xff]
        %v599 = vld [vmem:[#allocation7 + $0x68] sm:$0xff]
        %v600 = vld [vmem:[#allocation7 + $0x70] sm:$0xff]
        %v601 = vld [vmem:[#allocation7 + $0x78] sm:$0xff]
        %v602 = vld [vmem:[%s8] sm:$0x1]
        %v604 = vperm.slane %v602, 0
        %606 = vmatpush.msra.mxu0 %v601
        %607 = vmatpush.msra.mxu0 %v600
        %608 = vmatpush.msra.mxu0 %v599
        %609 = vmatpush.msra.mxu0 %v598
        %610 = vmatpush.msra.mxu0 %v597
        %611 = vmatpush.msra.mxu0 %v596
        %612 = vmatpush.msra.mxu0 %v595
        %613 = vmatpush.msra.mxu0 %v594
        %614 = vmatpush.msra.mxu0 %v593
        %615 = vmatpush.msra.mxu0 %v592
        %616 = vmatpush.msra.mxu0 %v591
        %617 = vmatpush.msra.mxu0 %v590
        %618 = vmatpush.msra.mxu0 %v589
        %619 = vmatpush.msra.mxu0 %v588
        %620 = vmatpush.msra.mxu0 %v587
        %621 = vmatpush.msra.mxu0 %v586
        %622 = vmatmul.f32.gmra.mxu0 %v585
        %v623 = vpop.f32.mrf.mxu0
        %v624 = vadd.f32 %v604, %v623
        %625 = vdwg.mxu0
        %626 = vst [vmem:[%s394] sm:$0xff] %v624
        %p627 = scmp.lt.s32.totalorder %s23, 1
        %s628 = scalar_select %p627, %s23, 1
        %s629 = smul.addr %s628, 8
        %s630 = scalar_lea.vmem %s9, %s629
        // Predicated region
        $region73: #{dqn_forward.1} parent=55 // pred_check
          %p631 = pneg %p235
        $region74: #{dqn_forward.1} parent=55 // pred_check_branch
          %633 = sbr.rel (%p631) target = $region76
        $region75: #{dqn_forward.1} parent=55 // pred_region
          _
        $region76: #{dqn_forward.1} parent=55 // pred_fallthru
          _
      $region56: #{dqn_forward.1} parent=5 // pred_fallthru
        _
      %p634 = scmp.le.s32.totalorder 2, %s18
      // Predicated region
      $region77: #{dqn_forward.1} parent=5 // pred_check
        %p635 = pneg %p634
      $region78: #{dqn_forward.1} parent=5 // pred_check_branch
        %637 = sbr.rel (%p635) target = $region80
      $region79: #{dqn_forward.1} parent=5 // pred_region
        %s638 = ssub.s32 %s18, 2
        // Predicated region
        $region81: #{dqn_forward.1} parent=79 // pred_check
          %p639 = pneg %p241
        $region82: #{dqn_forward.1} parent=79 // pred_check_branch
          %641 = sbr.rel (%p639) target = $region84
        $region83: #{dqn_forward.1} parent=79 // pred_region
          %p642 = scmp.lt.s32.totalorder %s24, 1
          %s643 = scalar_select %p642, %s24, 1
          %s644 = smul.addr %s643, 8
          %s645 = scalar_lea.vmem %s9, %s644
        $region84: #{dqn_forward.1} parent=79 // pred_fallthru
          _
      $region80: #{dqn_forward.1} parent=5 // pred_fallthru
        _
    $region6: #{dqn_forward.1} parent=1 // loop_footer
      %s22 = sadd.s32 1, %s18
    $region7: #{dqn_forward.1} parent=1 // loop_footer_branch
      %17 = sbr.rel target = $region3
    $region8: #{dqn_forward.1} parent=1 // loop_exit
      _
    %646 = vsyncpa [#allocation3], 1
    %s647 = scalar_lea.sflag [#allocation3], 1
    %648 = vsyncpa %s647, 1
    %649 = vsyncpa [#allocation5], 1
    %650 = vsyncpa [#allocation8], 1

</llo_original>
